<compile_context>
chip_gen: v7x
topology: tpu7x:2x2x1
jax: 0.10.0
libtpu: 0.0.40
codegen_flags: <defaults>
</compile_context>

<pallas_src>
import jax
import jax.numpy as jnp
from jax.experimental import pallas as pl
from jax.experimental.pallas import tpu as pltpu

# Layer dims of the torch module: (in_features, out_features) per layer.
_DIMS = [(65, 16), (16, 12), (12, 8), (8, 2)]
_TB_MAX = 4096  # largest batch tile; fits the VMEM scoped default everywhere


def _round_up(n, m):
    return ((n + m - 1) // m) * m


def mlp_kernel(x_ref, w_ref, b_ref, o_ref):
    # x_ref: (tb, 65) f32 batch tile.
    # w_ref: (4, 65, 16) f32 packed weights (each layer zero-padded to 65x16).
    # b_ref: (4, 1, 16)  f32 packed biases.
    #
    # Tail grid step: rows past B contain stale VMEM data; they are computed
    # but never written back (rows are independent, no cross-row reduction),
    # so garbage/NaN in those rows is harmless.  Keep it that way if editing.
    x = x_ref[...]

    w1 = w_ref[0]                    # (65, 16)
    w2 = w_ref[1][:16, :12]
    w3 = w_ref[2][:12, :8]
    w4 = w_ref[3][:8, :2]
    b1 = b_ref[0]                    # (1, 16)
    b2 = b_ref[1][:, :12]
    b3 = b_ref[2][:, :8]
    b4 = b_ref[3][:, :2]

    h = jnp.maximum(jnp.dot(x, w1, preferred_element_type=jnp.float32) + b1, 0.0)
    h = jnp.maximum(jnp.dot(h, w2, preferred_element_type=jnp.float32) + b2, 0.0)
    h = jnp.maximum(jnp.dot(h, w3, preferred_element_type=jnp.float32) + b3, 0.0)
    out = jnp.dot(h, w4, preferred_element_type=jnp.float32) + b4
    o_ref[...] = out.astype(o_ref.dtype)


def _pick_tile(B):
    # >= 2 roughly-even "parallel" steps for moderate B (keeps both v7x TCs
    # busy), capped at _TB_MAX so large B amortizes the ~0.35 us per-step
    # pipeline overhead without blowing the VMEM scoped default.
    half = _round_up(max(1, -(-B // 2)), 8)
    return max(8, min(half, _TB_MAX))


def ann_ss_forward(x, wpack, bpack, *, tb=None):
    """x: (B, 65) f32.  wpack: (4, 65, 16) f32.  bpack: (4, 1, 16) f32."""
    B, d_in = x.shape
    assert d_in == 65
    if tb is None:
        tb = _pick_tile(B)
    tb = _round_up(tb, 8)

    grid = (pl.cdiv(B, tb),)

    flops = 2 * B * sum(i * o for i, o in _DIMS)
    bytes_accessed = (B * 65 * 4 + B * 2 * 4
                      + int(wpack.size) * 4 + int(bpack.size) * 4)

    return pl.pallas_call(
        mlp_kernel,
        out_shape=jax.ShapeDtypeStruct((B, 2), jnp.float32),
        grid_spec=pltpu.PrefetchScalarGridSpec(
            num_scalar_prefetch=0,
            grid=grid,
            in_specs=[
                pl.BlockSpec((tb, 65), lambda i: (i, 0)),        # x tile over batch
                pl.BlockSpec((4, 65, 16), lambda i: (0, 0, 0)),  # weights (loaded once)
                pl.BlockSpec((4, 1, 16), lambda i: (0, 0, 0)),   # biases (loaded once)
            ],
            out_specs=pl.BlockSpec((tb, 2), lambda i: (i, 0)),
        ),
        compiler_params=pltpu.CompilerParams(
            dimension_semantics=("parallel",)),
        cost_estimate=pl.CostEstimate(
            flops=flops, transcendentals=0, bytes_accessed=bytes_accessed),
    )(x, wpack, bpack)


def init_params(key):
    """PyTorch nn.Linear-style init (uniform +/- 1/sqrt(fan_in)); weights are
    stored as (in, out) = transpose of torch's (out, in)."""
    params = {}
    for idx, (fan_in, fan_out) in enumerate(_DIMS, start=1):
        key, kw, kb = jax.random.split(key, 3)
        bound = 1.0 / (fan_in ** 0.5)
        params[f"w{idx}"] = jax.random.uniform(
            kw, (fan_in, fan_out), jnp.float32, -bound, bound)
        params[f"b{idx}"] = jax.random.uniform(
            kb, (1, fan_out), jnp.float32, -bound, bound)
    return params


def pack_params(params):
    """Pack the 4 layers into one zero-padded weight array and one bias array.
    Done once, outside the per-call hot path."""
    wpack = jnp.zeros((4, 65, 16), jnp.float32)
    bpack = jnp.zeros((4, 1, 16), jnp.float32)
    for idx, (fan_in, fan_out) in enumerate(_DIMS, start=1):
        wpack = wpack.at[idx - 1, :fan_in, :fan_out].set(params[f"w{idx}"])
        bpack = bpack.at[idx - 1, :, :fan_out].set(params[f"b{idx}"])
    return wpack, bpack


def ann_ss_reference(x, params):
    """Pure f32 JAX reference (same math as the PyTorch module)."""
    h = x
    for i in range(1, 4):
        h = jnp.maximum(h @ params[f"w{i}"] + params[f"b{i}"], 0.0)
    return h @ params["w4"] + params["b4"]


if __name__ == "__main__":
    key = jax.random.PRNGKey(0)
    key, kx = jax.random.split(key)
    params = init_params(key)
    wpack, bpack = pack_params(params)

    # Small batch (single step) + a non-multiple-of-8 batch (2 steps, tail block).
    for B in (4, 300):
        kx, sub = jax.random.split(kx)
        x = jax.random.normal(sub, (B, 65), jnp.float32)

        out = jax.block_until_ready(ann_ss_forward(x, wpack, bpack))
        assert out.shape == (B, 2), out.shape

        ref = ann_ss_reference(x, params)
        # Tolerance covers possible MXU-pass precision differences between the
        # in-kernel dot and the XLA reference dot; the math is f32 on both sides.
        assert jnp.allclose(out, ref, atol=2e-2, rtol=2e-2), \
            float(jnp.max(jnp.abs(out - ref)))

    print("KERNEL_OK")
</pallas_src>

<mosaic_0001>
module attributes {stable_mosaic.version = 11 : i64} {
  func.func @mlp_kernel(%arg0: i32, %arg1: memref<8x65xf32, #tpu.memory_space<vmem>>, %arg2: memref<4x65x16xf32, #tpu.memory_space<vmem>>, %arg3: memref<4x1x16xf32, #tpu.memory_space<vmem>>, %arg4: memref<8x2xf32, #tpu.memory_space<vmem>>) attributes {dimension_semantics = [#tpu.dimension_semantics<parallel>], iteration_bounds = array<i64: 1>, scalar_prefetch = 0 : i64, scratch_operands = 0 : i64, tpu.core_type = #tpu.core_type<tc>, window_params = [{transform_indices = @transform_0, window_bounds = array<i64: 8, 65>}, {pipeline_mode = #tpu.pipeline_mode<synchronous>, transform_indices = @transform_1, window_bounds = array<i64: 4, 65, 16>}, {pipeline_mode = #tpu.pipeline_mode<synchronous>, transform_indices = @transform_2, window_bounds = array<i64: 4, 1, 16>}, {transform_indices = @transform_3, window_bounds = array<i64: 8, 2>}]} {
    %c0 = arith.constant 0 : index
    %c0_0 = arith.constant 0 : index
    %0 = vector.load %arg1[%c0, %c0_0] : memref<8x65xf32, #tpu.memory_space<vmem>>, vector<8x65xf32>
    %c0_1 = arith.constant 0 : index
    %c0_2 = arith.constant 0 : index
    %c0_3 = arith.constant 0 : index
    %1 = vector.load %arg2[%c0_1, %c0_2, %c0_3] : memref<4x65x16xf32, #tpu.memory_space<vmem>>, vector<1x65x16xf32>
    %2 = vector.shape_cast %1 : vector<1x65x16xf32> to vector<65x16xf32>
    %c1 = arith.constant 1 : index
    %c0_4 = arith.constant 0 : index
    %c0_5 = arith.constant 0 : index
    %3 = vector.load %arg2[%c1, %c0_4, %c0_5] : memref<4x65x16xf32, #tpu.memory_space<vmem>>, vector<1x65x16xf32>
    %4 = vector.shape_cast %3 : vector<1x65x16xf32> to vector<65x16xf32>
    %5 = vector.extract_strided_slice %4 {offsets = [0, 0], sizes = [16, 12], strides = [1, 1]} : vector<65x16xf32> to vector<16x12xf32>
    %c2 = arith.constant 2 : index
    %c0_6 = arith.constant 0 : index
    %c0_7 = arith.constant 0 : index
    %6 = vector.load %arg2[%c2, %c0_6, %c0_7] : memref<4x65x16xf32, #tpu.memory_space<vmem>>, vector<1x65x16xf32>
    %7 = vector.shape_cast %6 : vector<1x65x16xf32> to vector<65x16xf32>
    %8 = vector.extract_strided_slice %7 {offsets = [0, 0], sizes = [12, 8], strides = [1, 1]} : vector<65x16xf32> to vector<12x8xf32>
    %c3 = arith.constant 3 : index
    %c0_8 = arith.constant 0 : index
    %c0_9 = arith.constant 0 : index
    %9 = vector.load %arg2[%c3, %c0_8, %c0_9] : memref<4x65x16xf32, #tpu.memory_space<vmem>>, vector<1x65x16xf32>
    %10 = vector.shape_cast %9 : vector<1x65x16xf32> to vector<65x16xf32>
    %11 = vector.extract_strided_slice %10 {offsets = [0, 0], sizes = [8, 2], strides = [1, 1]} : vector<65x16xf32> to vector<8x2xf32>
    %c0_10 = arith.constant 0 : index
    %c0_11 = arith.constant 0 : index
    %c0_12 = arith.constant 0 : index
    %12 = vector.load %arg3[%c0_10, %c0_11, %c0_12] : memref<4x1x16xf32, #tpu.memory_space<vmem>>, vector<1x1x16xf32>
    %13 = vector.shape_cast %12 : vector<1x1x16xf32> to vector<1x16xf32>
    %c1_13 = arith.constant 1 : index
    %c0_14 = arith.constant 0 : index
    %c0_15 = arith.constant 0 : index
    %14 = vector.load %arg3[%c1_13, %c0_14, %c0_15] : memref<4x1x16xf32, #tpu.memory_space<vmem>>, vector<1x1x16xf32>
    %15 = vector.shape_cast %14 : vector<1x1x16xf32> to vector<1x16xf32>
    %16 = vector.extract_strided_slice %15 {offsets = [0, 0], sizes = [1, 12], strides = [1, 1]} : vector<1x16xf32> to vector<1x12xf32>
    %c2_16 = arith.constant 2 : index
    %c0_17 = arith.constant 0 : index
    %c0_18 = arith.constant 0 : index
    %17 = vector.load %arg3[%c2_16, %c0_17, %c0_18] : memref<4x1x16xf32, #tpu.memory_space<vmem>>, vector<1x1x16xf32>
    %18 = vector.shape_cast %17 : vector<1x1x16xf32> to vector<1x16xf32>
    %19 = vector.extract_strided_slice %18 {offsets = [0, 0], sizes = [1, 8], strides = [1, 1]} : vector<1x16xf32> to vector<1x8xf32>
    %c3_19 = arith.constant 3 : index
    %c0_20 = arith.constant 0 : index
    %c0_21 = arith.constant 0 : index
    %20 = vector.load %arg3[%c3_19, %c0_20, %c0_21] : memref<4x1x16xf32, #tpu.memory_space<vmem>>, vector<1x1x16xf32>
    %21 = vector.shape_cast %20 : vector<1x1x16xf32> to vector<1x16xf32>
    %22 = vector.extract_strided_slice %21 {offsets = [0, 0], sizes = [1, 2], strides = [1, 1]} : vector<1x16xf32> to vector<1x2xf32>
    %cst = arith.constant dense<0.000000e+00> : vector<8x16xf32>
    %23 = tpu.matmul %0, %2, %cst {dimension_numbers = #tpu.dot_dimension_numbers<[1], [0], [0], [1], [0, 0, 1, 1], [], []>} : vector<8x65xf32>, vector<65x16xf32>, vector<8x16xf32> -> vector<8x16xf32>
    %24 = vector.broadcast %13 : vector<1x16xf32> to vector<8x16xf32>
    %25 = arith.addf %23, %24 : vector<8x16xf32>
    %cst_22 = arith.constant 0.000000e+00 : f32
    %26 = vector.broadcast %cst_22 : f32 to vector<8x16xf32>
    %27 = arith.maximumf %25, %26 : vector<8x16xf32>
    %cst_23 = arith.constant dense<0.000000e+00> : vector<8x12xf32>
    %28 = tpu.matmul %27, %5, %cst_23 {dimension_numbers = #tpu.dot_dimension_numbers<[1], [0], [0], [1], [0, 0, 1, 1], [], []>} : vector<8x16xf32>, vector<16x12xf32>, vector<8x12xf32> -> vector<8x12xf32>
    %29 = vector.broadcast %16 : vector<1x12xf32> to vector<8x12xf32>
    %30 = arith.addf %28, %29 : vector<8x12xf32>
    %cst_24 = arith.constant 0.000000e+00 : f32
    %31 = vector.broadcast %cst_24 : f32 to vector<8x12xf32>
    %32 = arith.maximumf %30, %31 : vector<8x12xf32>
    %cst_25 = arith.constant dense<0.000000e+00> : vector<8x8xf32>
    %33 = tpu.matmul %32, %8, %cst_25 {dimension_numbers = #tpu.dot_dimension_numbers<[1], [0], [0], [1], [0, 0, 1, 1], [], []>} : vector<8x12xf32>, vector<12x8xf32>, vector<8x8xf32> -> vector<8x8xf32>
    %34 = vector.broadcast %19 : vector<1x8xf32> to vector<8x8xf32>
    %35 = arith.addf %33, %34 : vector<8x8xf32>
    %cst_26 = arith.constant 0.000000e+00 : f32
    %36 = vector.broadcast %cst_26 : f32 to vector<8x8xf32>
    %37 = arith.maximumf %35, %36 : vector<8x8xf32>
    %cst_27 = arith.constant dense<0.000000e+00> : vector<8x2xf32>
    %38 = tpu.matmul %37, %11, %cst_27 {dimension_numbers = #tpu.dot_dimension_numbers<[1], [0], [0], [1], [0, 0, 1, 1], [], []>} : vector<8x8xf32>, vector<8x2xf32>, vector<8x2xf32> -> vector<8x2xf32>
    %39 = vector.broadcast %22 : vector<1x2xf32> to vector<8x2xf32>
    %40 = arith.addf %38, %39 : vector<8x2xf32>
    %c0_28 = arith.constant 0 : index
    %c0_29 = arith.constant 0 : index
    %41 = vector.load %arg4[%c0_28, %c0_29] : memref<8x2xf32, #tpu.memory_space<vmem>>, vector<8x2xf32>
    tpu.vector_store %arg4[%c0_28, %c0_29], %40 {strides = array<i32>} : memref<8x2xf32, #tpu.memory_space<vmem>>, vector<8x2xf32>,
    return
  }
  func.func @transform_0(%arg0: i32) -> (i32, i32) {
    %c0_i32 = arith.constant 0 : i32
    %c0_i32_0 = arith.constant 0 : i32
    return %arg0, %c0_i32 : i32, i32
  }
  func.func @transform_1(%arg0: i32) -> (i32, i32, i32) {
    %c0_i32 = arith.constant 0 : i32
    %c0_i32_0 = arith.constant 0 : i32
    %c0_i32_1 = arith.constant 0 : i32
    %c0_i32_2 = arith.constant 0 : i32
    return %c0_i32, %c0_i32_0, %c0_i32_1 : i32, i32, i32
  }
  func.func @transform_2(%arg0: i32) -> (i32, i32, i32) {
    %c0_i32 = arith.constant 0 : i32
    %c0_i32_0 = arith.constant 0 : i32
    %c0_i32_1 = arith.constant 0 : i32
    %c0_i32_2 = arith.constant 0 : i32
    return %c0_i32, %c0_i32_0, %c0_i32_1 : i32, i32, i32
  }
  func.func @transform_3(%arg0: i32) -> (i32, i32) {
    %c0_i32 = arith.constant 0 : i32
    %c0_i32_0 = arith.constant 0 : i32
    return %arg0, %c0_i32 : i32, i32
  }
}

</mosaic_0001>

<llo_original>
// kernel: tpu_custom_call.1
$region0: #{tpu_custom_call.1}
  #allocation0 [shape = 'u32[]', space=smem, size = 0x4, offset = 0x4, fixed_abs, tag = 'smem constant byte address 0x4 - core index']
  #allocation1 [shape = 'u32[144,128]{1,0:T(1,128)}', space=vmem, size = 0x12000, scoped, tag = 'internal scratch']
  %s0 = inlined_call_operand.vmem [shape: f32[4,65], index: 0, kind: input, shape index: {}]
  %s1 = inlined_call_operand.vmem [shape: f32[4,65,16], index: 1, kind: input, shape index: {}]
  %s2 = inlined_call_operand.vmem [shape: f32[4,1,16], index: 2, kind: input, shape index: {}]
  %s3 = inlined_call_operand.vmem [shape: f32[4,2], index: 3, kind: output, shape index: {}]
  %s4 = sld [smem:[#allocation0]]
  $region52: #{tpu_custom_call.1} parent=0
    _
  %s6 = ssub.s32 1, %s4
  %s7 = scalar_select 0, %s6, %s4
  $region1: #{tpu_custom_call.1} parent=0
    #allocation2 [shape = 'u8[4096]{0}', space=vmem, size = 0x1000, scoped, tag = 'output window, operand 0, single buffered']
    // Predicated region
    $region2: #{tpu_custom_call.1} parent=1 // pred_check
      _
    $region3: #{tpu_custom_call.1} parent=1 // pred_check_branch
      %9 = sbr.rel (0) target = $region5
    $region4: #{tpu_custom_call.1} parent=1 // pred_region
      _
    $region5: #{tpu_custom_call.1} parent=1 // pred_fallthru
      _
    // Predicated region
    $region6: #{tpu_custom_call.1} parent=1 // pred_check
      _
    $region7: #{tpu_custom_call.1} parent=1 // pred_check_branch
      %11 = sbr.rel (0) target = $region9
    $region8: #{tpu_custom_call.1} parent=1 // pred_region
      _
    $region9: #{tpu_custom_call.1} parent=1 // pred_fallthru
      _
    // Predicated region
    $region10: #{tpu_custom_call.1} parent=1 // pred_check
      _
    $region11: #{tpu_custom_call.1} parent=1 // pred_check_branch
      %13 = sbr.rel (0) target = $region13
    $region12: #{tpu_custom_call.1} parent=1 // pred_region
      _
    $region13: #{tpu_custom_call.1} parent=1 // pred_fallthru
      _
    %v14 = vld [vmem:[%s0] sm:$0xff]
    %v15 = vld [vmem:[%s1] sm:$0xff]
    %v16 = vld [vmem:[%s1 + $0x8] sm:$0xff]
    %v17 = vld [vmem:[%s1 + $0x10] sm:$0xff]
    %v18 = vld [vmem:[%s1 + $0x18] sm:$0xff]
    %v19 = vld [vmem:[%s1 + $0x20] sm:$0xff]
    %v20 = vld [vmem:[%s1 + $0x28] sm:$0xff]
    %v21 = vld [vmem:[%s1 + $0x30] sm:$0xff]
    %v22 = vld [vmem:[%s1 + $0x38] sm:$0xff]
    %v23 = vld [vmem:[%s1 + $0x40] sm:$0x1]
    %s24 = scalar_lea.vmem %s1, 72
    %v25 = vld [vmem:[%s24] sm:$0xff]
    %v26 = vld [vmem:[%s24 + $0x8] sm:$0xff]
    %s27 = scalar_lea.vmem %s1, 144
    %v28 = vld [vmem:[%s27] sm:$0xff]
    %v29 = vld [vmem:[%s27 + $0x8] sm:$0xff]
    %s30 = scalar_lea.vmem %s1, 216
    %v31 = vld [vmem:[%s30] sm:$0xff]
    %v32 = vld [vmem:[%s2] sm:$0x1]
    %s33 = scalar_lea.vmem %s2, 1
    %v34 = vld [vmem:[%s33] sm:$0x1]
    %s35 = scalar_lea.vmem %s2, 2
    %v36 = vld [vmem:[%s35] sm:$0x1]
    %s37 = scalar_lea.vmem %s2, 3
    %v38 = vld [vmem:[%s37] sm:$0x1]
    %v40 = vlaneseq
    %v41 = vshrl.u32 %v40, 7
    %v42 = vsub.s32 0, %v41
    %v43 = vrot.slane %v32, %v42
    %vm45 = vcmask 531456
    %v47 = vsel %vm45, %v14, 0
    %vm49 = vcmask 1040384
    %v51 = vsel %vm49, %v23, 0
    %53 = vmatprep.subr.mxu0 0.0
    %54 = vmatpush1.msra.mxu0 %v15
    %55 = vmatprep.subr.mxu0 0.0
    %56 = vmatpush1.msra.mxu0 %v16
    %57 = vmatprep.subr.mxu0 0.0
    %58 = vmatpush1.msra.mxu0 %v17
    %59 = vmatprep.subr.mxu0 0.0
    %60 = vmatpush1.msra.mxu0 %v18
    %61 = vmatprep.subr.mxu0 0.0
    %62 = vmatpush1.msra.mxu0 %v19
    %63 = vmatprep.subr.mxu0 0.0
    %64 = vmatpush1.msra.mxu0 %v20
    %65 = vmatprep.subr.mxu0 0.0
    %66 = vmatpush1.msra.mxu0 %v21
    %67 = vmatprep.subr.mxu0 0.0
    %68 = vmatpush1.msra.mxu0 %v22
    %69 = vmatprep.subr.mxu0 0.0
    %70 = vmatpush1.msra.mxu0 %v51
    %71 = vmatprep.subr.mxu0 0.0
    %72 = vmatpush1.msra.mxu0 0.0
    %73 = vmatprep.subr.mxu0 0.0
    %74 = vmatpush1.msra.mxu0 0.0
    %75 = vmatprep.subr.mxu0 0.0
    %76 = vmatpush1.msra.mxu0 0.0
    %77 = vmatprep.subr.mxu0 0.0
    %78 = vmatpush1.msra.mxu0 0.0
    %79 = vmatprep.subr.mxu0 0.0
    %80 = vmatpush1.msra.mxu0 0.0
    %81 = vmatprep.subr.mxu0 0.0
    %82 = vmatpush1.msra.mxu0 0.0
    %83 = vmatprep.subr.mxu0 0.0
    %84 = vmatpush1.msra.mxu0 0.0
    %85 = vmatprep.subr.mxu0 0.0
    %86 = vmatpush1.msra.mxu0 0.0
    %87 = vmatprep.subr.mxu0 0.0
    %88 = vmatpush1.msra.mxu0 0.0
    %89 = vmatprep.subr.mxu0 0.0
    %90 = vmatpush1.msra.mxu0 0.0
    %91 = vmatprep.subr.mxu0 0.0
    %92 = vmatpush1.msra.mxu0 0.0
    %93 = vmatprep.subr.mxu0 0.0
    %94 = vmatpush1.msra.mxu0 0.0
    %95 = vmatprep.subr.mxu0 0.0
    %96 = vmatpush1.msra.mxu0 0.0
    %97 = vmatprep.subr.mxu0 0.0
    %98 = vmatpush1.msra.mxu0 0.0
    %99 = vmatprep.subr.mxu0 0.0
    %100 = vmatpush1.msra.mxu0 0.0
    %101 = vmatprep.subr.mxu0 0.0
    %102 = vmatpush1.msra.mxu0 0.0
    %103 = vmatprep.subr.mxu0 0.0
    %104 = vmatpush1.msra.mxu0 0.0
    %105 = vmatprep.subr.mxu0 0.0
    %106 = vmatpush1.msra.mxu0 0.0
    %107 = vmatprep.subr.mxu0 0.0
    %108 = vmatpush1.msra.mxu0 0.0
    %109 = vmatprep.subr.mxu0 0.0
    %110 = vmatpush1.msra.mxu0 0.0
    %111 = vmatprep.subr.mxu0 0.0
    %112 = vmatpush1.msra.mxu0 0.0
    %113 = vmatprep.subr.mxu0 0.0
    %114 = vmatpush1.msra.mxu0 0.0
    %115 = vmatprep.subr.mxu0 0.0
    %116 = vmatpush1.msra.mxu0 0.0
    %117 = vmatprep.mubr.f32.mxu0 0.0
    %118 = vmatmul.mubr.f32.gmra.mrb[0].mxu0 %v47
    %v119 = vpop.f32.mrb[0].mxu0
    %v120 = vadd.f32 %v43, %v119
    %v121 = vpop.f32.mrb[0].mxu0
    %122 = vdwg.mxu0
    %v123 = vmax.f32 %v120, 0.0
    %v125 = vlaneseq
    %v126 = vshrl.u32 %v125, 7
    %v127 = vsub.s32 0, %v126
    %v128 = vrot.slane %v34, %v127
    %vm130 = vcmask 130048
    %v132 = vsel %vm130, %v123, 0
    %134 = vmatprep.subr.mxu0 0.0
    %135 = vmatpush1.msra.mxu0 %v25
    %136 = vmatprep.subr.mxu0 0.0
    %137 = vmatpush1.msra.mxu0 %v26
    %138 = vmatprep.subr.mxu0 0.0
    %139 = vmatpush1.msra.mxu0 0.0
    %140 = vmatprep.subr.mxu0 0.0
    %141 = vmatpush1.msra.mxu0 0.0
    %142 = vmatprep.subr.mxu0 0.0
    %143 = vmatpush1.msra.mxu0 0.0
    %144 = vmatprep.subr.mxu0 0.0
    %145 = vmatpush1.msra.mxu0 0.0
    %146 = vmatprep.subr.mxu0 0.0
    %147 = vmatpush1.msra.mxu0 0.0
    %148 = vmatprep.subr.mxu0 0.0
    %149 = vmatpush1.msra.mxu0 0.0
    %150 = vmatprep.subr.mxu0 0.0
    %151 = vmatpush1.msra.mxu0 0.0
    %152 = vmatprep.subr.mxu0 0.0
    %153 = vmatpush1.msra.mxu0 0.0
    %154 = vmatprep.subr.mxu0 0.0
    %155 = vmatpush1.msra.mxu0 0.0
    %156 = vmatprep.subr.mxu0 0.0
    %157 = vmatpush1.msra.mxu0 0.0
    %158 = vmatprep.subr.mxu0 0.0
    %159 = vmatpush1.msra.mxu0 0.0
    %160 = vmatprep.subr.mxu0 0.0
    %161 = vmatpush1.msra.mxu0 0.0
    %162 = vmatprep.subr.mxu0 0.0
    %163 = vmatpush1.msra.mxu0 0.0
    %164 = vmatprep.subr.mxu0 0.0
    %165 = vmatpush1.msra.mxu0 0.0
    %166 = vmatprep.subr.mxu0 0.0
    %167 = vmatpush1.msra.mxu0 0.0
    %168 = vmatprep.subr.mxu0 0.0
    %169 = vmatpush1.msra.mxu0 0.0
    %170 = vmatprep.subr.mxu0 0.0
    %171 = vmatpush1.msra.mxu0 0.0
    %172 = vmatprep.subr.mxu0 0.0
    %173 = vmatpush1.msra.mxu0 0.0
    %174 = vmatprep.subr.mxu0 0.0
    %175 = vmatpush1.msra.mxu0 0.0
    %176 = vmatprep.subr.mxu0 0.0
    %177 = vmatpush1.msra.mxu0 0.0
    %178 = vmatprep.subr.mxu0 0.0
    %179 = vmatpush1.msra.mxu0 0.0
    %180 = vmatprep.subr.mxu0 0.0
    %181 = vmatpush1.msra.mxu0 0.0
    %182 = vmatprep.subr.mxu0 0.0
    %183 = vmatpush1.msra.mxu0 0.0
    %184 = vmatprep.subr.mxu0 0.0
    %185 = vmatpush1.msra.mxu0 0.0
    %186 = vmatprep.subr.mxu0 0.0
    %187 = vmatpush1.msra.mxu0 0.0
    %188 = vmatprep.subr.mxu0 0.0
    %189 = vmatpush1.msra.mxu0 0.0
    %190 = vmatprep.subr.mxu0 0.0
    %191 = vmatpush1.msra.mxu0 0.0
    %192 = vmatprep.subr.mxu0 0.0
    %193 = vmatpush1.msra.mxu0 0.0
    %194 = vmatprep.subr.mxu0 0.0
    %195 = vmatpush1.msra.mxu0 0.0
    %196 = vmatprep.subr.mxu0 0.0
    %197 = vmatpush1.msra.mxu0 0.0
    %198 = vmatprep.mubr.f32.mxu0 0.0
    %199 = vmatmul.mubr.f32.gmra.mrb[0].mxu0 %v132
    %v200 = vpop.f32.mrb[0].mxu0
    %v201 = vadd.f32 %v128, %v200
    %v202 = vpop.f32.mrb[0].mxu0
    %203 = vdwg.mxu0
    %v204 = vmax.f32 %v201, 0.0
    %v206 = vlaneseq
    %v207 = vshrl.u32 %v206, 7
    %v208 = vsub.s32 0, %v207
    %v209 = vrot.slane %v36, %v208
    %vm211 = vcmask 97280
    %v213 = vsel %vm211, %v204, 0
    %vm215 = vcmask 1043456
    %v217 = vsel %vm215, %v29, 0
    %219 = vmatprep.subr.mxu0 0.0
    %220 = vmatpush1.msra.mxu0 %v28
    %221 = vmatprep.subr.mxu0 0.0
    %222 = vmatpush1.msra.mxu0 %v217
    %223 = vmatprep.subr.mxu0 0.0
    %224 = vmatpush1.msra.mxu0 0.0
    %225 = vmatprep.subr.mxu0 0.0
    %226 = vmatpush1.msra.mxu0 0.0
    %227 = vmatprep.subr.mxu0 0.0
    %228 = vmatpush1.msra.mxu0 0.0
    %229 = vmatprep.subr.mxu0 0.0
    %230 = vmatpush1.msra.mxu0 0.0
    %231 = vmatprep.subr.mxu0 0.0
    %232 = vmatpush1.msra.mxu0 0.0
    %233 = vmatprep.subr.mxu0 0.0
    %234 = vmatpush1.msra.mxu0 0.0
    %235 = vmatprep.subr.mxu0 0.0
    %236 = vmatpush1.msra.mxu0 0.0
    %237 = vmatprep.subr.mxu0 0.0
    %238 = vmatpush1.msra.mxu0 0.0
    %239 = vmatprep.subr.mxu0 0.0
    %240 = vmatpush1.msra.mxu0 0.0
    %241 = vmatprep.subr.mxu0 0.0
    %242 = vmatpush1.msra.mxu0 0.0
    %243 = vmatprep.subr.mxu0 0.0
    %244 = vmatpush1.msra.mxu0 0.0
    %245 = vmatprep.subr.mxu0 0.0
    %246 = vmatpush1.msra.mxu0 0.0
    %247 = vmatprep.subr.mxu0 0.0
    %248 = vmatpush1.msra.mxu0 0.0
    %249 = vmatprep.subr.mxu0 0.0
    %250 = vmatpush1.msra.mxu0 0.0
    %251 = vmatprep.subr.mxu0 0.0
    %252 = vmatpush1.msra.mxu0 0.0
    %253 = vmatprep.subr.mxu0 0.0
    %254 = vmatpush1.msra.mxu0 0.0
    %255 = vmatprep.subr.mxu0 0.0
    %256 = vmatpush1.msra.mxu0 0.0
    %257 = vmatprep.subr.mxu0 0.0
    %258 = vmatpush1.msra.mxu0 0.0
    %259 = vmatprep.subr.mxu0 0.0
    %260 = vmatpush1.msra.mxu0 0.0
    %261 = vmatprep.subr.mxu0 0.0
    %262 = vmatpush1.msra.mxu0 0.0
    %263 = vmatprep.subr.mxu0 0.0
    %264 = vmatpush1.msra.mxu0 0.0
    %265 = vmatprep.subr.mxu0 0.0
    %266 = vmatpush1.msra.mxu0 0.0
    %267 = vmatprep.subr.mxu0 0.0
    %268 = vmatpush1.msra.mxu0 0.0
    %269 = vmatprep.subr.mxu0 0.0
    %270 = vmatpush1.msra.mxu0 0.0
    %271 = vmatprep.subr.mxu0 0.0
    %272 = vmatpush1.msra.mxu0 0.0
    %273 = vmatprep.subr.mxu0 0.0
    %274 = vmatpush1.msra.mxu0 0.0
    %275 = vmatprep.subr.mxu0 0.0
    %276 = vmatpush1.msra.mxu0 0.0
    %277 = vmatprep.subr.mxu0 0.0
    %278 = vmatpush1.msra.mxu0 0.0
    %279 = vmatprep.subr.mxu0 0.0
    %280 = vmatpush1.msra.mxu0 0.0
    %281 = vmatprep.subr.mxu0 0.0
    %282 = vmatpush1.msra.mxu0 0.0
    %283 = vmatprep.mubr.f32.mxu0 0.0
    %284 = vmatmul.mubr.f32.gmra.mrb[0].mxu0 %v213
    %v285 = vpop.f32.mrb[0].mxu0
    %v286 = vadd.f32 %v209, %v285
    %v287 = vpop.f32.mrb[0].mxu0
    %288 = vdwg.mxu0
    %v289 = vmax.f32 %v286, 0.0
    %v291 = vlaneseq
    %v292 = vshrl.u32 %v291, 7
    %v293 = vsub.s32 0, %v292
    %v294 = vrot.slane %v38, %v293
    %vm296 = vcmask 64512
    %v298 = vsel %vm296, %v289, 0
    %300 = vmatprep.subr.mxu0 0.0
    %301 = vmatpush1.msra.mxu0 %v31
    %302 = vmatprep.subr.mxu0 0.0
    %303 = vmatpush1.msra.mxu0 0.0
    %304 = vmatprep.subr.mxu0 0.0
    %305 = vmatpush1.msra.mxu0 0.0
    %306 = vmatprep.subr.mxu0 0.0
    %307 = vmatpush1.msra.mxu0 0.0
    %308 = vmatprep.subr.mxu0 0.0
    %309 = vmatpush1.msra.mxu0 0.0
    %310 = vmatprep.subr.mxu0 0.0
    %311 = vmatpush1.msra.mxu0 0.0
    %312 = vmatprep.subr.mxu0 0.0
    %313 = vmatpush1.msra.mxu0 0.0
    %314 = vmatprep.subr.mxu0 0.0
    %315 = vmatpush1.msra.mxu0 0.0
    %316 = vmatprep.subr.mxu0 0.0
    %317 = vmatpush1.msra.mxu0 0.0
    %318 = vmatprep.subr.mxu0 0.0
    %319 = vmatpush1.msra.mxu0 0.0
    %320 = vmatprep.subr.mxu0 0.0
    %321 = vmatpush1.msra.mxu0 0.0
    %322 = vmatprep.subr.mxu0 0.0
    %323 = vmatpush1.msra.mxu0 0.0
    %324 = vmatprep.subr.mxu0 0.0
    %325 = vmatpush1.msra.mxu0 0.0
    %326 = vmatprep.subr.mxu0 0.0
    %327 = vmatpush1.msra.mxu0 0.0
    %328 = vmatprep.subr.mxu0 0.0
    %329 = vmatpush1.msra.mxu0 0.0
    %330 = vmatprep.subr.mxu0 0.0
    %331 = vmatpush1.msra.mxu0 0.0
    %332 = vmatprep.subr.mxu0 0.0
    %333 = vmatpush1.msra.mxu0 0.0
    %334 = vmatprep.subr.mxu0 0.0
    %335 = vmatpush1.msra.mxu0 0.0
    %336 = vmatprep.subr.mxu0 0.0
    %337 = vmatpush1.msra.mxu0 0.0
    %338 = vmatprep.subr.mxu0 0.0
    %339 = vmatpush1.msra.mxu0 0.0
    %340 = vmatprep.subr.mxu0 0.0
    %341 = vmatpush1.msra.mxu0 0.0
    %342 = vmatprep.subr.mxu0 0.0
    %343 = vmatpush1.msra.mxu0 0.0
    %344 = vmatprep.subr.mxu0 0.0
    %345 = vmatpush1.msra.mxu0 0.0
    %346 = vmatprep.subr.mxu0 0.0
    %347 = vmatpush1.msra.mxu0 0.0
    %348 = vmatprep.subr.mxu0 0.0
    %349 = vmatpush1.msra.mxu0 0.0
    %350 = vmatprep.subr.mxu0 0.0
    %351 = vmatpush1.msra.mxu0 0.0
    %352 = vmatprep.subr.mxu0 0.0
    %353 = vmatpush1.msra.mxu0 0.0
    %354 = vmatprep.subr.mxu0 0.0
    %355 = vmatpush1.msra.mxu0 0.0
    %356 = vmatprep.subr.mxu0 0.0
    %357 = vmatpush1.msra.mxu0 0.0
    %358 = vmatprep.subr.mxu0 0.0
    %359 = vmatpush1.msra.mxu0 0.0
    %360 = vmatprep.subr.mxu0 0.0
    %361 = vmatpush1.msra.mxu0 0.0
    %362 = vmatprep.subr.mxu0 0.0
    %363 = vmatpush1.msra.mxu0 0.0
    %364 = vmatprep.mubr.f32.mxu0 0.0
    %365 = vmatmul.mubr.f32.gmra.mrb[0].mxu0 %v298
    %v366 = vpop.f32.mrb[0].mxu0
    %v367 = vadd.f32 %v294, %v366
    %v368 = vpop.f32.mrb[0].mxu0
    %369 = vdwg.mxu0
    %vm370 = vcmask 15360
    %371 = vst.msk [vmem:[#allocation2] sm:$0xff] %vm370, %v367
    // Predicated region
    $region14: #{tpu_custom_call.1} parent=1 // pred_check
      _
    $region15: #{tpu_custom_call.1} parent=1 // pred_check_branch
      %373 = sbr.rel (0) target = $region17
    $region16: #{tpu_custom_call.1} parent=1 // pred_region
      // Predicated region
      $region18: #{tpu_custom_call.1} parent=16 // pred_check
        _
      $region19: #{tpu_custom_call.1} parent=16 // pred_check_branch
        %375 = sbr.rel (0) target = $region21
      $region20: #{tpu_custom_call.1} parent=16 // pred_region
        // Predicated region
        $region22: #{tpu_custom_call.1} parent=20 // pred_check
          _
        $region23: #{tpu_custom_call.1} parent=20 // pred_check_branch
          %377 = sbr.rel target = $region25
        $region24: #{tpu_custom_call.1} parent=20 // pred_region
          // Predicated region
          $region37: #{tpu_custom_call.1} parent=24 // pred_check
            _
          $region38: #{tpu_custom_call.1} parent=24 // pred_check_branch
            %392 = sbr.rel (0) target = $region40
          $region39: #{tpu_custom_call.1} parent=24 // pred_region
            loop: start=0, step=1, limit=1
            $region41: #{tpu_custom_call.1} parent=39 // loop_pre_header
              _
            $region42: #{tpu_custom_call.1} parent=39 // loop_header
              %s395 = sphi 0, %s399
              %p396 = scmp.ge.s32.totalorder %s395, 1
              %s400 = sphi [#allocation2], [#allocation2]
              %s401 = sphi %s3, %s3
            $region43: #{tpu_custom_call.1} parent=39 // loop_header_branch
              %398 = sbr.rel (%p396) target = $region47
            $region44: #{tpu_custom_call.1} parent=39 // loop_body
              %v402 = vld [vmem:[%s400] sm:$0xf]
              %403 = vst [vmem:[%s401] sm:$0xf] %v402
            $region45: #{tpu_custom_call.1} parent=39 // loop_footer
              %s399 = sadd.s32 1, %s395
            $region46: #{tpu_custom_call.1} parent=39 // loop_footer_branch
              %394 = sbr.rel target = $region42
            $region47: #{tpu_custom_call.1} parent=39 // loop_exit
              _
          $region40: #{tpu_custom_call.1} parent=24 // pred_fallthru
            _
        $region25: #{tpu_custom_call.1} parent=20 // pred_fallthru
          _
        // Predicated region
        $region26: #{tpu_custom_call.1} parent=20 // pred_check
          _
        $region27: #{tpu_custom_call.1} parent=20 // pred_check_branch
          %379 = sbr.rel (0) target = $region29
        $region28: #{tpu_custom_call.1} parent=20 // pred_region
          loop: start=0, step=1, limit=1
          $region30: #{tpu_custom_call.1} parent=28 // loop_pre_header
            _
          $region31: #{tpu_custom_call.1} parent=28 // loop_header
            %s382 = sphi 0, %s386
            %p383 = scmp.ge.s32.totalorder %s382, 1
            %s387 = sphi [#allocation2], [#allocation2]
            %s388 = sphi %s3, %s3
          $region32: #{tpu_custom_call.1} parent=28 // loop_header_branch
            %385 = sbr.rel (%p383) target = $region36
          $region33: #{tpu_custom_call.1} parent=28 // loop_body
            %v389 = vld [vmem:[%s387] sm:$0xf]
            %390 = vst [vmem:[%s388] sm:$0xf] %v389
          $region34: #{tpu_custom_call.1} parent=28 // loop_footer
            %s386 = sadd.s32 1, %s382
          $region35: #{tpu_custom_call.1} parent=28 // loop_footer_branch
            %381 = sbr.rel target = $region31
          $region36: #{tpu_custom_call.1} parent=28 // loop_exit
            _
        $region29: #{tpu_custom_call.1} parent=20 // pred_fallthru
          _
      $region21: #{tpu_custom_call.1} parent=16 // pred_fallthru
        _
      %404 = vnop
    $region17: #{tpu_custom_call.1} parent=1 // pred_fallthru
      _
    // Predicated region
    $region48: #{tpu_custom_call.1} parent=1 // pred_check
      _
    $region49: #{tpu_custom_call.1} parent=1 // pred_check_branch
      %406 = sbr.rel (0) target = $region51
    $region50: #{tpu_custom_call.1} parent=1 // pred_region
      _
    $region51: #{tpu_custom_call.1} parent=1 // pred_fallthru
      _

</llo_original>
